<compile_context>
chip_gen: v5e
topology: v5e:2x2
jax: 0.10.0
libtpu: 0.0.40
codegen_flags: <defaults>
</compile_context>

<pallas_src>
import jax
import jax.numpy as jnp
from jax.experimental import pallas as pl
from jax.experimental.pallas import tpu as pltpu


def _edge_score_kernel(tab_ref, b_ref, src_ref, dst_ref, out_ref):
    # tab_ref: (C, 2N)   stacked pre-projected table (transposed), VMEM resident
    # b_ref  : (C, 1)    bias (broadcast over edges)
    # src_ref: (1, TE)   int32 source node index per edge (this tile)
    # dst_ref: (1, TE)   int32 destination node index per edge (this tile)
    # out_ref: (C, TE)   transposed scores for this tile
    tab = tab_ref[...]
    two_n = tab.shape[1]
    n_nodes = two_n // 2
    te = out_ref.shape[1]

    # Fused, transposed one-hot: row r of column e is 1 iff r == src[e]
    # or r == N + dst[e] (the two halves are disjoint, so a logical OR is an
    # exact two-hot selector).
    row_iota = jax.lax.broadcasted_iota(jnp.int32, (two_n, te), 0)   # (2N, TE)
    sel = jnp.logical_or(row_iota == src_ref[...],
                         row_iota == (dst_ref[...] + n_nodes))
    onehot_t = sel.astype(tab.dtype)                                 # (2N, TE)

    # One MXU dot: (C, 2N) @ (2N, TE) -> (C, TE), f32 accumulation.
    y = jnp.dot(tab, onehot_t, preferred_element_type=jnp.float32)
    out_ref[...] = (y + b_ref[...]).astype(out_ref.dtype)


def hetero_mlp_predictor(h_team, src_idx, dst_idx, W, b, *, edge_tile=512,
                         table_dtype=None):
    """Pallas implementation of HeteroMLPPredictor.forward.

    h_team : [N, in_dims]             node features for node type 'team'
    src_idx: [E] int                  edge source node indices
    dst_idx: [E] int                  edge destination node indices
    W      : [n_classes, 2*in_dims]   PyTorch nn.Linear weight layout
    b      : [n_classes]
    table_dtype: optional dtype (e.g. jnp.bfloat16) for the MXU operands on
                 v6e/v7x; None keeps full f32.
    returns: [E, n_classes]           edge scores
    """
    assert edge_tile % 128 == 0, "edge_tile must be a multiple of 128 (lanes)"
    E = src_idx.shape[0]
    N, in_dims = h_team.shape
    n_classes = W.shape[0]
    assert W.shape[1] == 2 * in_dims

    # Pad edge count up to a tile multiple (padded columns use node 0; their
    # results are sliced off below).
    n_tiles = pl.cdiv(E, edge_tile)
    e_pad = n_tiles * edge_tile
    pad = e_pad - E
    src_p = jnp.pad(src_idx.astype(jnp.int32), (0, pad)).reshape(1, e_pad)
    dst_p = jnp.pad(dst_idx.astype(jnp.int32), (0, pad)).reshape(1, e_pad)

    # Pre-project the node table against the split weights (tiny XLA matmul,
    # done once):  concat(h[s], h[d]) @ W.T == hW_src[s] + hW_dst[d].
    # Stored stacked + transposed: (C, 2N), src half then dst half.
    w_src = W[:, :in_dims]                       # (C, D)
    w_dst = W[:, in_dims:]                       # (C, D)
    tab_src = jnp.dot(w_src, h_team.T, precision=jax.lax.Precision.HIGHEST)
    tab_dst = jnp.dot(w_dst, h_team.T, precision=jax.lax.Precision.HIGHEST)
    tab_t = jnp.concatenate([tab_src, tab_dst], axis=1)   # (C, 2N)
    if table_dtype is not None:
        tab_t = tab_t.astype(table_dtype)
    b2d = b.reshape(n_classes, 1).astype(jnp.float32)      # (C, 1)

    out_t = pl.pallas_call(
        _edge_score_kernel,
        out_shape=jax.ShapeDtypeStruct((n_classes, e_pad), h_team.dtype),
        grid_spec=pltpu.PrefetchScalarGridSpec(
            num_scalar_prefetch=0,
            grid=(n_tiles,),
            in_specs=[
                # Constant block index -> fetched once, VMEM resident.
                pl.BlockSpec((n_classes, 2 * N), lambda i: (0, 0)),
                pl.BlockSpec((n_classes, 1), lambda i: (0, 0)),
                # Per-tile lane-dense edge endpoint indices.
                pl.BlockSpec((1, edge_tile), lambda i: (0, i)),
                pl.BlockSpec((1, edge_tile), lambda i: (0, i)),
            ],
            out_specs=pl.BlockSpec((n_classes, edge_tile), lambda i: (0, i)),
        ),
        compiler_params=pltpu.CompilerParams(
            dimension_semantics=("parallel",)),
    )(tab_t, b2d, src_p, dst_p)

    # (C, e_pad) -> (E, C): tiny transpose + tail slice in the wrapper.
    return out_t[:, :E].T


def _reference(h_team, src_idx, dst_idx, W, b):
    x = jnp.concatenate([h_team[src_idx], h_team[dst_idx]], axis=1)
    return x @ W.T + b


if __name__ == "__main__":
    # Small synthetic "graph": N nodes of type 'team', E edges between them.
    # NOTE: the DGL graph plumbing (local_scope / apply_edges) is just gather
    # glue; the edge scoring math is what runs in the Pallas kernel.
    in_dims = 16
    n_classes = 8
    num_nodes = 64
    num_edges = 1000          # deliberately NOT a multiple of the edge tile

    key = jax.random.PRNGKey(0)
    k_h, k_w, k_b, k_src, k_dst = jax.random.split(key, 5)

    h_team = jax.random.normal(k_h, (num_nodes, in_dims), dtype=jnp.float32)

    # Deterministic nn.Linear-style init: W [n_classes, 2*in_dims], b [n_classes]
    bound = 1.0 / jnp.sqrt(jnp.float32(2 * in_dims))
    W = jax.random.uniform(k_w, (n_classes, 2 * in_dims),
                           minval=-bound, maxval=bound, dtype=jnp.float32)
    b = jax.random.uniform(k_b, (n_classes,),
                           minval=-bound, maxval=bound, dtype=jnp.float32)

    src_idx = jax.random.randint(k_src, (num_edges,), 0, num_nodes)
    dst_idx = jax.random.randint(k_dst, (num_edges,), 0, num_nodes)

    score = hetero_mlp_predictor(h_team, src_idx, dst_idx, W, b, edge_tile=512)
    score = jax.block_until_ready(score)

    ref = _reference(h_team, src_idx, dst_idx, W, b)
    assert score.shape == (num_edges, n_classes)
    assert jnp.allclose(score, ref, atol=1e-4, rtol=1e-4)

    print("KERNEL_OK")
</pallas_src>

<mosaic_0001>
module attributes {stable_mosaic.version = 11 : i64} {
  func.func @_edge_score_kernel(%arg0: i32, %arg1: memref<8x128xf32, #tpu.memory_space<vmem>>, %arg2: memref<8x1xf32, #tpu.memory_space<vmem>>, %arg3: memref<1x512xi32, #tpu.memory_space<vmem>>, %arg4: memref<1x512xi32, #tpu.memory_space<vmem>>, %arg5: memref<8x512xf32, #tpu.memory_space<vmem>>) attributes {dimension_semantics = [#tpu.dimension_semantics<parallel>], iteration_bounds = array<i64: 2>, scalar_prefetch = 0 : i64, scratch_operands = 0 : i64, tpu.core_type = #tpu.core_type<tc>, window_params = [{pipeline_mode = #tpu.pipeline_mode<synchronous>, transform_indices = @transform_0, window_bounds = array<i64: 8, 128>}, {pipeline_mode = #tpu.pipeline_mode<synchronous>, transform_indices = @transform_1, window_bounds = array<i64: 8, 1>}, {transform_indices = @transform_2, window_bounds = array<i64: 1, 512>}, {transform_indices = @transform_3, window_bounds = array<i64: 1, 512>}, {transform_indices = @transform_4, window_bounds = array<i64: 8, 512>}]} {
    %c0 = arith.constant 0 : index
    %c0_0 = arith.constant 0 : index
    %0 = vector.load %arg1[%c0, %c0_0] : memref<8x128xf32, #tpu.memory_space<vmem>>, vector<8x128xf32>
    %1 = tpu.iota {dimensions = array<i32: 0>} : vector<128x512xi32>
    %c0_1 = arith.constant 0 : index
    %c0_2 = arith.constant 0 : index
    %2 = vector.load %arg3[%c0_1, %c0_2] : memref<1x512xi32, #tpu.memory_space<vmem>>, vector<1x512xi32>
    %3 = vector.broadcast %2 : vector<1x512xi32> to vector<128x512xi32>
    %4 = arith.cmpi eq, %1, %3 : vector<128x512xi32>
    %c0_3 = arith.constant 0 : index
    %c0_4 = arith.constant 0 : index
    %5 = vector.load %arg4[%c0_3, %c0_4] : memref<1x512xi32, #tpu.memory_space<vmem>>, vector<1x512xi32>
    %c64_i32 = arith.constant 64 : i32
    %6 = vector.broadcast %c64_i32 : i32 to vector<1x512xi32>
    %7 = arith.addi %5, %6 : vector<1x512xi32>
    %8 = vector.broadcast %7 : vector<1x512xi32> to vector<128x512xi32>
    %9 = arith.cmpi eq, %1, %8 : vector<128x512xi32>
    %10 = arith.ori %4, %9 : vector<128x512xi1>
    %11 = arith.extui %10 : vector<128x512xi1> to vector<128x512xi32>
    %12 = arith.sitofp %11 : vector<128x512xi32> to vector<128x512xf32>
    %cst = arith.constant dense<0.000000e+00> : vector<8x512xf32>
    %13 = tpu.matmul %0, %12, %cst {dimension_numbers = #tpu.dot_dimension_numbers<[1], [0], [0], [1], [0, 0, 1, 1], [], []>} : vector<8x128xf32>, vector<128x512xf32>, vector<8x512xf32> -> vector<8x512xf32>
    %c0_5 = arith.constant 0 : index
    %c0_6 = arith.constant 0 : index
    %14 = vector.load %arg2[%c0_5, %c0_6] : memref<8x1xf32, #tpu.memory_space<vmem>>, vector<8x1xf32>
    %15 = vector.broadcast %14 : vector<8x1xf32> to vector<8x512xf32>
    %16 = arith.addf %13, %15 : vector<8x512xf32>
    %c0_7 = arith.constant 0 : index
    %c0_8 = arith.constant 0 : index
    %17 = vector.load %arg5[%c0_7, %c0_8] : memref<8x512xf32, #tpu.memory_space<vmem>>, vector<8x512xf32>
    tpu.vector_store %arg5[%c0_7, %c0_8], %16 {strides = array<i32>} : memref<8x512xf32, #tpu.memory_space<vmem>>, vector<8x512xf32>,
    return
  }
  func.func @transform_0(%arg0: i32) -> (i32, i32) {
    %c0_i32 = arith.constant 0 : i32
    %c0_i32_0 = arith.constant 0 : i32
    %c0_i32_1 = arith.constant 0 : i32
    return %c0_i32, %c0_i32_0 : i32, i32
  }
  func.func @transform_1(%arg0: i32) -> (i32, i32) {
    %c0_i32 = arith.constant 0 : i32
    %c0_i32_0 = arith.constant 0 : i32
    %c0_i32_1 = arith.constant 0 : i32
    return %c0_i32, %c0_i32_0 : i32, i32
  }
  func.func @transform_2(%arg0: i32) -> (i32, i32) {
    %c0_i32 = arith.constant 0 : i32
    %c0_i32_0 = arith.constant 0 : i32
    return %c0_i32, %arg0 : i32, i32
  }
  func.func @transform_3(%arg0: i32) -> (i32, i32) {
    %c0_i32 = arith.constant 0 : i32
    %c0_i32_0 = arith.constant 0 : i32
    return %c0_i32, %arg0 : i32, i32
  }
  func.func @transform_4(%arg0: i32) -> (i32, i32) {
    %c0_i32 = arith.constant 0 : i32
    %c0_i32_0 = arith.constant 0 : i32
    return %c0_i32, %arg0 : i32, i32
  }
}

</mosaic_0001>

<llo_original>
// kernel: tpu_custom_call.1
$region0: #{tpu_custom_call.1}
  #allocation0 [shape = 'u32[]', space=smem, size = 0x4, offset = 0x4, fixed_abs, tag = 'smem constant byte address 0x4 - core index']
  #allocation1 [shape = 'u32[72,128]{1,0:T(1,128)}', space=vmem, size = 0x9000, scoped, tag = 'internal scratch']
  %s0 = inlined_call_operand.vmem [shape: f32[8,128], index: 0, kind: input, shape index: {}]
  %s1 = inlined_call_operand.vmem [shape: f32[8,1], index: 1, kind: input, shape index: {}]
  %s2 = inlined_call_operand.hbm [shape: s32[1,1024], index: 2, kind: input, shape index: {}]
  %s3 = inlined_call_operand.hbm [shape: s32[1,1024], index: 3, kind: input, shape index: {}]
  %s4 = inlined_call_operand.hbm [shape: f32[8,1024], index: 4, kind: output, shape index: {}]
  %s5 = sld [smem:[#allocation0]]
  $region57: #{tpu_custom_call.1} parent=0
    _
  %s7 = ssub.s32 1, %s5
  %s8 = scalar_select 0, %s7, %s5
  $region1: #{tpu_custom_call.1} parent=0
    #allocation2 [shape = 'u8[4096]{0}', space=vmem, size = 0x1000, scoped, tag = 'input window, operand 2']
    #allocation3 [shape = 's32[2]{0}', space=sflag, size = 0x8, scoped, tag = 'scoped memory for tpu_custom_call.1']
    #allocation4 [shape = 's32[2]{0}', space=sflag, size = 0x8, scoped, tag = 'scoped memory for tpu_custom_call.1']
    #allocation5 [shape = 'u8[4096]{0}', space=vmem, size = 0x1000, scoped, tag = 'input window, operand 3']
    #allocation6 [shape = 's32[2]{0}', space=sflag, size = 0x8, scoped, tag = 'scoped memory for tpu_custom_call.1']
    #allocation7 [shape = 'u8[32768]{0}', space=vmem, size = 0x8000, scoped, tag = 'output window, operand 0']
    %9 = vsyncpa [#allocation3], 0
    %s10 = scalar_lea.sflag [#allocation3], 1
    %11 = vsyncpa %s10, 0
    %12 = vsyncpa [#allocation6], 0
    %s13 = scalar_lea.sflag [#allocation6], 1
    %14 = vsyncpa %s13, 0
    %15 = vsyncpa [#allocation4], 0
    %s16 = scalar_lea.sflag [#allocation4], 1
    %17 = vsyncpa %s16, 0
    loop: start=0, step=1, limit=4
    $region2: #{tpu_custom_call.1} parent=1 // loop_pre_header
      _
    $region3: #{tpu_custom_call.1} parent=1 // loop_header
      %s19 = sphi 0, %s23
      %p20 = scmp.ge.s32.totalorder %s19, 4
      %s27 = sphi 0, %s27
      %s29 = sphi 0, %s27
      %s30 = sphi 0, %s29
      %s44 = sphi 0, %s30
      %s48 = sphi 0, %s48
      %s50 = sphi 0, %s48
      %s51 = sphi 0, %s50
      %s65 = sphi 0, %s51
      %s71 = sphi 0, %s73
      %s74 = sphi 0, %s71
      %s75 = sphi 0, %s74
      %s91 = sphi 0, %s75
      %s97 = sphi 0, %s99
      %s100 = sphi 0, %s97
      %s101 = sphi 0, %s100
      %s117 = sphi 0, %s101
      %s123 = sphi 0, %s125
      %s126 = sphi 0, %s123
      %s127 = sphi 0, %s126
      %s143 = sphi 0, %s127
    $region4: #{tpu_custom_call.1} parent=1 // loop_header_branch
      %22 = sbr.rel (%p20) target = $region8
    $region5: #{tpu_custom_call.1} parent=1 // loop_body
      %s24 = ssub.s32 %s19, 1
      %s25 = ssub.s32 %s19, 2
      %s26 = sadd.s32 %s19, 1
      %s28 = sadd.s32 %s27, 1
      %p31 = scmp.eq.s32.totalorder %s19, 1
      %p32 = scmp.ne.s32.totalorder %s27, %s29
      %p33 = scmp.eq.s32.totalorder %s19, 0
      %p34 = por %p32, %p33
      %p35 = scmp.ne.s32.totalorder %s27, %s29
      %p36 = scmp.eq.s32.totalorder %s24, 1
      %p37 = por %p35, %p36
      %p38 = scmp.ne.s32.totalorder %s29, %s30
      %p39 = scmp.eq.s32.totalorder %s24, 0
      %p40 = por %p38, %p39
      %p41 = scmp.ne.s32.totalorder %s29, %s30
      %p42 = scmp.eq.s32.totalorder %s25, 1
      %p43 = por %p41, %p42
      %p45 = scmp.ne.s32.totalorder %s30, %s44
      %p46 = scmp.eq.s32.totalorder %s25, 0
      %p47 = por %p45, %p46
      %s49 = sadd.s32 %s48, 1
      %p52 = scmp.eq.s32.totalorder %s19, 1
      %p53 = scmp.ne.s32.totalorder %s48, %s50
      %p54 = scmp.eq.s32.totalorder %s19, 0
      %p55 = por %p53, %p54
      %p56 = scmp.ne.s32.totalorder %s48, %s50
      %p57 = scmp.eq.s32.totalorder %s24, 1
      %p58 = por %p56, %p57
      %p59 = scmp.ne.s32.totalorder %s50, %s51
      %p60 = scmp.eq.s32.totalorder %s24, 0
      %p61 = por %p59, %p60
      %p62 = scmp.ne.s32.totalorder %s50, %s51
      %p63 = scmp.eq.s32.totalorder %s25, 1
      %p64 = por %p62, %p63
      %p66 = scmp.ne.s32.totalorder %s51, %s65
      %p67 = scmp.eq.s32.totalorder %s25, 0
      %p68 = por %p66, %p67
      %s69 = ssub.s32 %s19, %s26
      %p70 = scmp.eq.s32.totalorder %s69, 0
      %s72 = sadd.s32 %s71, 1
      %s73 = scalar_select %p70, %s71, %s72
      %p76 = pneg %p70
      %p77 = scmp.eq.s32.totalorder %s19, 1
      %p78 = por %p76, %p77
      %p79 = scmp.ne.s32.totalorder %s71, %s74
      %p80 = scmp.eq.s32.totalorder %s19, 0
      %p81 = por %p79, %p80
      %p82 = scmp.ne.s32.totalorder %s71, %s74
      %p83 = scmp.eq.s32.totalorder %s24, 1
      %p84 = por %p82, %p83
      %p85 = scmp.ne.s32.totalorder %s74, %s75
      %p86 = scmp.eq.s32.totalorder %s24, 0
      %p87 = por %p85, %p86
      %p88 = scmp.ne.s32.totalorder %s74, %s75
      %p89 = scmp.eq.s32.totalorder %s25, 1
      %p90 = por %p88, %p89
      %p92 = scmp.ne.s32.totalorder %s75, %s91
      %p93 = scmp.eq.s32.totalorder %s25, 0
      %p94 = por %p92, %p93
      %s95 = ssub.s32 %s19, %s26
      %p96 = scmp.eq.s32.totalorder %s95, 0
      %s98 = sadd.s32 %s97, 1
      %s99 = scalar_select %p96, %s97, %s98
      %p102 = pneg %p96
      %p103 = scmp.eq.s32.totalorder %s19, 1
      %p104 = por %p102, %p103
      %p105 = scmp.ne.s32.totalorder %s97, %s100
      %p106 = scmp.eq.s32.totalorder %s19, 0
      %p107 = por %p105, %p106
      %p108 = scmp.ne.s32.totalorder %s97, %s100
      %p109 = scmp.eq.s32.totalorder %s24, 1
      %p110 = por %p108, %p109
      %p111 = scmp.ne.s32.totalorder %s100, %s101
      %p112 = scmp.eq.s32.totalorder %s24, 0
      %p113 = por %p111, %p112
      %p114 = scmp.ne.s32.totalorder %s100, %s101
      %p115 = scmp.eq.s32.totalorder %s25, 1
      %p116 = por %p114, %p115
      %p118 = scmp.ne.s32.totalorder %s101, %s117
      %p119 = scmp.eq.s32.totalorder %s25, 0
      %p120 = por %p118, %p119
      %s121 = ssub.s32 %s19, %s26
      %p122 = scmp.eq.s32.totalorder %s121, 0
      %s124 = sadd.s32 %s123, 1
      %s125 = scalar_select %p122, %s123, %s124
      %p128 = pneg %p122
      %p129 = scmp.eq.s32.totalorder %s19, 1
      %p130 = por %p128, %p129
      %p131 = scmp.ne.s32.totalorder %s123, %s126
      %p132 = scmp.eq.s32.totalorder %s19, 0
      %p133 = por %p131, %p132
      %p134 = scmp.ne.s32.totalorder %s123, %s126
      %p135 = scmp.eq.s32.totalorder %s24, 1
      %p136 = por %p134, %p135
      %p137 = scmp.ne.s32.totalorder %s126, %s127
      %p138 = scmp.eq.s32.totalorder %s24, 0
      %p139 = por %p137, %p138
      %p140 = scmp.ne.s32.totalorder %s126, %s127
      %p141 = scmp.eq.s32.totalorder %s25, 1
      %p142 = por %p140, %p141
      %p144 = scmp.ne.s32.totalorder %s127, %s143
      %p145 = scmp.eq.s32.totalorder %s25, 0
      %p146 = por %p144, %p145
      %p147 = scmp.le.s32.totalorder 1, %s19
      %p148 = scmp.lt.s32.totalorder %s19, 3
      %p149 = pnand %p147, %p148
      %p150 = pneg %p149
      // Predicated region
      $region9: #{tpu_custom_call.1} parent=5 // pred_check
        _
      $region10: #{tpu_custom_call.1} parent=5 // pred_check_branch
        %152 = sbr.rel (%p149) target = $region12
      $region11: #{tpu_custom_call.1} parent=5 // pred_region
        %s153 = ssub.s32 %s19, 1
        // Predicated region
        $region13: #{tpu_custom_call.1} parent=11 // pred_check
          %p154 = pneg %p40
        $region14: #{tpu_custom_call.1} parent=11 // pred_check_branch
          %156 = sbr.rel (%p154) target = $region16
        $region15: #{tpu_custom_call.1} parent=11 // pred_region
          _
        $region16: #{tpu_custom_call.1} parent=11 // pred_fallthru
          _
        // Predicated region
        $region17: #{tpu_custom_call.1} parent=11 // pred_check
          %p157 = pneg %p61
        $region18: #{tpu_custom_call.1} parent=11 // pred_check_branch
          %159 = sbr.rel (%p157) target = $region20
        $region19: #{tpu_custom_call.1} parent=11 // pred_region
          _
        $region20: #{tpu_custom_call.1} parent=11 // pred_fallthru
          _
      $region12: #{tpu_custom_call.1} parent=5 // pred_fallthru
        _
      %p160 = scmp.lt.s32.totalorder %s19, 2
      // Predicated region
      $region21: #{tpu_custom_call.1} parent=5 // pred_check
        %p161 = pneg %p160
      $region22: #{tpu_custom_call.1} parent=5 // pred_check_branch
        %163 = sbr.rel (%p161) target = $region24
      $region23: #{tpu_custom_call.1} parent=5 // pred_region
        // Predicated region
        $region25: #{tpu_custom_call.1} parent=23 // pred_check
          %p164 = pneg %p81
        $region26: #{tpu_custom_call.1} parent=23 // pred_check_branch
          %166 = sbr.rel (%p164) target = $region28
        $region27: #{tpu_custom_call.1} parent=23 // pred_region
          %s167 = sand.u32 %s71, 1
          %s168 = scalar_lea.sflag [#allocation3], %s167
          %s169 = sand.u32 %s71, 1
          %s170 = smul.addr %s169, 4
          %s171 = scalar_lea.vmem [#allocation2], %s170
          %s172 = smul.u32 4, %s19
          %174 = vsyncadd %s168, 0
          %s175 = scalar_lea.hbm %s2, %s172
          %s177 = sshll.u32 %s175, 4
          %s178 = int_to_ptr.hbm [resolvable:$true] %s177
          %s179 = sshll.u32 %s171, 4
          %s180 = int_to_ptr.vmem [resolvable:$true] %s179
          %182 = dma.hbm_to_vmem [thread:$0]  %s178, 64, %s180, %s168
        $region28: #{tpu_custom_call.1} parent=23 // pred_fallthru
          _
        // Predicated region
        $region29: #{tpu_custom_call.1} parent=23 // pred_check
          %p183 = pneg %p107
        $region30: #{tpu_custom_call.1} parent=23 // pred_check_branch
          %185 = sbr.rel (%p183) target = $region32
        $region31: #{tpu_custom_call.1} parent=23 // pred_region
          %s186 = sand.u32 %s97, 1
          %s187 = scalar_lea.sflag [#allocation6], %s186
          %s188 = sand.u32 %s97, 1
          %s189 = smul.addr %s188, 4
          %s190 = scalar_lea.vmem [#allocation5], %s189
          %s191 = smul.u32 4, %s19
          %193 = vsyncadd %s187, 0
          %s194 = scalar_lea.hbm %s3, %s191
          %s196 = sshll.u32 %s194, 4
          %s197 = int_to_ptr.hbm [resolvable:$true] %s196
          %s198 = sshll.u32 %s190, 4
          %s199 = int_to_ptr.vmem [resolvable:$true] %s198
          %201 = dma.hbm_to_vmem [thread:$0]  %s197, 64, %s199, %s187
        $region32: #{tpu_custom_call.1} parent=23 // pred_fallthru
          _
      $region24: #{tpu_custom_call.1} parent=5 // pred_fallthru
        _
      %p202 = scmp.le.s32.totalorder 1, %s19
      %p203 = scmp.lt.s32.totalorder %s19, 3
      %p204 = pnand %p202, %p203
      %p205 = pneg %p204
      // Predicated region
      $region33: #{tpu_custom_call.1} parent=5 // pred_check
        _
      $region34: #{tpu_custom_call.1} parent=5 // pred_check_branch
        %207 = sbr.rel (%p204) target = $region36
      $region35: #{tpu_custom_call.1} parent=5 // pred_region
        %s208 = ssub.s32 %s19, 1
        %s209 = sand.u32 %s74, 1
        %s210 = scalar_lea.sflag [#allocation3], %s209
        %s211 = sand.u32 %s74, 1
        %s212 = smul.addr %s211, 4
        %s213 = scalar_lea.vmem [#allocation2], %s212
        // Predicated region
        $region37: #{tpu_custom_call.1} parent=35 // pred_check
          %p214 = pneg %p87
        $region38: #{tpu_custom_call.1} parent=35 // pred_check_branch
          %216 = sbr.rel (%p214) target = $region40
        $region39: #{tpu_custom_call.1} parent=35 // pred_region
          %218 = dma.done %s210, 64
        $region40: #{tpu_custom_call.1} parent=35 // pred_fallthru
          _
        %s219 = sand.u32 %s100, 1
        %s220 = scalar_lea.sflag [#allocation6], %s219
        %s221 = sand.u32 %s100, 1
        %s222 = smul.addr %s221, 4
        %s223 = scalar_lea.vmem [#allocation5], %s222
        // Predicated region
        $region41: #{tpu_custom_call.1} parent=35 // pred_check
          %p224 = pneg %p113
        $region42: #{tpu_custom_call.1} parent=35 // pred_check_branch
          %226 = sbr.rel (%p224) target = $region44
        $region43: #{tpu_custom_call.1} parent=35 // pred_region
          %228 = dma.done %s220, 64
        $region44: #{tpu_custom_call.1} parent=35 // pred_fallthru
          _
        %p229 = pneg %p40
        %p230 = pneg %p37
        %p231 = pneg %p61
        %p232 = pneg %p58
        %s233 = sand.u32 %s74, 1
        %s234 = scalar_lea.sflag [#allocation3], %s233
        %s235 = sand.u32 %s74, 1
        %s236 = smul.addr %s235, 4
        %s237 = scalar_lea.vmem [#allocation2], %s236
        %p238 = pneg %p87
        %p239 = pneg %p84
        %s240 = sand.u32 %s100, 1
        %s241 = scalar_lea.sflag [#allocation6], %s240
        %s242 = sand.u32 %s100, 1
        %s243 = smul.addr %s242, 4
        %s244 = scalar_lea.vmem [#allocation5], %s243
        %p245 = pneg %p113
        %p246 = pneg %p110
        %p247 = pneg %p139
        %p248 = pneg %p136
        %s249 = sand.u32 %s126, 1
        %s250 = scalar_lea.sflag [#allocation4], %s249
        %s251 = sand.u32 %s126, 1
        %s252 = smul.addr %s251, 32
        %s253 = scalar_lea.vmem [#allocation7], %s252
        %s254 = smul.u32 4, %s24
        %s255 = smul.u32 4, %s24
        %s256 = smul.u32 4, %s24
        %v257 = vld [vmem:[%s0] sm:$0xff]
        %v258 = vlaneseq
        %v259 = vshrl.u32 %v258, 7
        %v260 = vadd.s32 %v259, 8
        %v261 = vadd.s32 %v259, 16
        %v262 = vadd.s32 %v259, 24
        %v263 = vadd.s32 %v259, 32
        %v264 = vadd.s32 %v259, 40
        %v265 = vadd.s32 %v259, 48
        %v266 = vadd.s32 %v259, 56
        %v267 = vadd.s32 %v259, 64
        %v268 = vadd.s32 %v259, 72
        %v269 = vadd.s32 %v259, 80
        %v270 = vadd.s32 %v259, 88
        %v271 = vadd.s32 %v259, 96
        %v272 = vadd.s32 %v259, 104
        %v273 = vadd.s32 %v259, 112
        %v274 = vadd.s32 %v259, 120
        %v275 = vld [vmem:[%s213] sm:$0xf]
        %v276 = vperm.slane %v275, 0
        %v277 = vperm.slane %v275, 1
        %v278 = vperm.slane %v275, 2
        %v279 = vperm.slane %v275, 3
        %vm280 = vcmp.eq.s32.totalorder %v259, %v276
        %vm281 = vcmp.eq.s32.totalorder %v259, %v277
        %vm282 = vcmp.eq.s32.totalorder %v259, %v278
        %vm283 = vcmp.eq.s32.totalorder %v259, %v279
        %vm284 = vcmp.eq.s32.totalorder %v260, %v276
        %vm285 = vcmp.eq.s32.totalorder %v260, %v277
        %vm286 = vcmp.eq.s32.totalorder %v260, %v278
        %vm287 = vcmp.eq.s32.totalorder %v260, %v279
        %vm288 = vcmp.eq.s32.totalorder %v261, %v276
        %vm289 = vcmp.eq.s32.totalorder %v261, %v277
        %vm290 = vcmp.eq.s32.totalorder %v261, %v278
        %vm291 = vcmp.eq.s32.totalorder %v261, %v279
        %vm292 = vcmp.eq.s32.totalorder %v262, %v276
        %vm293 = vcmp.eq.s32.totalorder %v262, %v277
        %vm294 = vcmp.eq.s32.totalorder %v262, %v278
        %vm295 = vcmp.eq.s32.totalorder %v262, %v279
        %vm296 = vcmp.eq.s32.totalorder %v263, %v276
        %vm297 = vcmp.eq.s32.totalorder %v263, %v277
        %vm298 = vcmp.eq.s32.totalorder %v263, %v278
        %vm299 = vcmp.eq.s32.totalorder %v263, %v279
        %vm300 = vcmp.eq.s32.totalorder %v264, %v276
        %vm301 = vcmp.eq.s32.totalorder %v264, %v277
        %vm302 = vcmp.eq.s32.totalorder %v264, %v278
        %vm303 = vcmp.eq.s32.totalorder %v264, %v279
        %vm304 = vcmp.eq.s32.totalorder %v265, %v276
        %vm305 = vcmp.eq.s32.totalorder %v265, %v277
        %vm306 = vcmp.eq.s32.totalorder %v265, %v278
        %vm307 = vcmp.eq.s32.totalorder %v265, %v279
        %vm308 = vcmp.eq.s32.totalorder %v266, %v276
        %vm309 = vcmp.eq.s32.totalorder %v266, %v277
        %vm310 = vcmp.eq.s32.totalorder %v266, %v278
        %vm311 = vcmp.eq.s32.totalorder %v266, %v279
        %vm312 = vcmp.eq.s32.totalorder %v267, %v276
        %vm313 = vcmp.eq.s32.totalorder %v267, %v277
        %vm314 = vcmp.eq.s32.totalorder %v267, %v278
        %vm315 = vcmp.eq.s32.totalorder %v267, %v279
        %vm316 = vcmp.eq.s32.totalorder %v268, %v276
        %vm317 = vcmp.eq.s32.totalorder %v268, %v277
        %vm318 = vcmp.eq.s32.totalorder %v268, %v278
        %vm319 = vcmp.eq.s32.totalorder %v268, %v279
        %vm320 = vcmp.eq.s32.totalorder %v269, %v276
        %vm321 = vcmp.eq.s32.totalorder %v269, %v277
        %vm322 = vcmp.eq.s32.totalorder %v269, %v278
        %vm323 = vcmp.eq.s32.totalorder %v269, %v279
        %vm324 = vcmp.eq.s32.totalorder %v270, %v276
        %vm325 = vcmp.eq.s32.totalorder %v270, %v277
        %vm326 = vcmp.eq.s32.totalorder %v270, %v278
        %vm327 = vcmp.eq.s32.totalorder %v270, %v279
        %vm328 = vcmp.eq.s32.totalorder %v271, %v276
        %vm329 = vcmp.eq.s32.totalorder %v271, %v277
        %vm330 = vcmp.eq.s32.totalorder %v271, %v278
        %vm331 = vcmp.eq.s32.totalorder %v271, %v279
        %vm332 = vcmp.eq.s32.totalorder %v272, %v276
        %vm333 = vcmp.eq.s32.totalorder %v272, %v277
        %vm334 = vcmp.eq.s32.totalorder %v272, %v278
        %vm335 = vcmp.eq.s32.totalorder %v272, %v279
        %vm336 = vcmp.eq.s32.totalorder %v273, %v276
        %vm337 = vcmp.eq.s32.totalorder %v273, %v277
        %vm338 = vcmp.eq.s32.totalorder %v273, %v278
        %vm339 = vcmp.eq.s32.totalorder %v273, %v279
        %vm340 = vcmp.eq.s32.totalorder %v274, %v276
        %vm341 = vcmp.eq.s32.totalorder %v274, %v277
        %vm342 = vcmp.eq.s32.totalorder %v274, %v278
        %vm343 = vcmp.eq.s32.totalorder %v274, %v279
        %v344 = vld [vmem:[%s223] sm:$0xf]
        %v345 = vadd.s32 %v344, 64
        %v346 = vperm.slane %v345, 0
        %v347 = vperm.slane %v345, 1
        %v348 = vperm.slane %v345, 2
        %v349 = vperm.slane %v345, 3
        %vm350 = vcmp.eq.s32.totalorder %v259, %v346
        %vm351 = vcmp.eq.s32.totalorder %v259, %v347
        %vm352 = vcmp.eq.s32.totalorder %v259, %v348
        %vm353 = vcmp.eq.s32.totalorder %v259, %v349
        %vm354 = vcmp.eq.s32.totalorder %v260, %v346
        %vm355 = vcmp.eq.s32.totalorder %v260, %v347
        %vm356 = vcmp.eq.s32.totalorder %v260, %v348
        %vm357 = vcmp.eq.s32.totalorder %v260, %v349
        %vm358 = vcmp.eq.s32.totalorder %v261, %v346
        %vm359 = vcmp.eq.s32.totalorder %v261, %v347
        %vm360 = vcmp.eq.s32.totalorder %v261, %v348
        %vm361 = vcmp.eq.s32.totalorder %v261, %v349
        %vm362 = vcmp.eq.s32.totalorder %v262, %v346
        %vm363 = vcmp.eq.s32.totalorder %v262, %v347
        %vm364 = vcmp.eq.s32.totalorder %v262, %v348
        %vm365 = vcmp.eq.s32.totalorder %v262, %v349
        %vm366 = vcmp.eq.s32.totalorder %v263, %v346
        %vm367 = vcmp.eq.s32.totalorder %v263, %v347
        %vm368 = vcmp.eq.s32.totalorder %v263, %v348
        %vm369 = vcmp.eq.s32.totalorder %v263, %v349
        %vm370 = vcmp.eq.s32.totalorder %v264, %v346
        %vm371 = vcmp.eq.s32.totalorder %v264, %v347
        %vm372 = vcmp.eq.s32.totalorder %v264, %v348
        %vm373 = vcmp.eq.s32.totalorder %v264, %v349
        %vm374 = vcmp.eq.s32.totalorder %v265, %v346
        %vm375 = vcmp.eq.s32.totalorder %v265, %v347
        %vm376 = vcmp.eq.s32.totalorder %v265, %v348
        %vm377 = vcmp.eq.s32.totalorder %v265, %v349
        %vm378 = vcmp.eq.s32.totalorder %v266, %v346
        %vm379 = vcmp.eq.s32.totalorder %v266, %v347
        %vm380 = vcmp.eq.s32.totalorder %v266, %v348
        %vm381 = vcmp.eq.s32.totalorder %v266, %v349
        %vm382 = vcmp.eq.s32.totalorder %v267, %v346
        %vm383 = vcmp.eq.s32.totalorder %v267, %v347
        %vm384 = vcmp.eq.s32.totalorder %v267, %v348
        %vm385 = vcmp.eq.s32.totalorder %v267, %v349
        %vm386 = vcmp.eq.s32.totalorder %v268, %v346
        %vm387 = vcmp.eq.s32.totalorder %v268, %v347
        %vm388 = vcmp.eq.s32.totalorder %v268, %v348
        %vm389 = vcmp.eq.s32.totalorder %v268, %v349
        %vm390 = vcmp.eq.s32.totalorder %v269, %v346
        %vm391 = vcmp.eq.s32.totalorder %v269, %v347
        %vm392 = vcmp.eq.s32.totalorder %v269, %v348
        %vm393 = vcmp.eq.s32.totalorder %v269, %v349
        %vm394 = vcmp.eq.s32.totalorder %v270, %v346
        %vm395 = vcmp.eq.s32.totalorder %v270, %v347
        %vm396 = vcmp.eq.s32.totalorder %v270, %v348
        %vm397 = vcmp.eq.s32.totalorder %v270, %v349
        %vm398 = vcmp.eq.s32.totalorder %v271, %v346
        %vm399 = vcmp.eq.s32.totalorder %v271, %v347
        %vm400 = vcmp.eq.s32.totalorder %v271, %v348
        %vm401 = vcmp.eq.s32.totalorder %v271, %v349
        %vm402 = vcmp.eq.s32.totalorder %v272, %v346
        %vm403 = vcmp.eq.s32.totalorder %v272, %v347
        %vm404 = vcmp.eq.s32.totalorder %v272, %v348
        %vm405 = vcmp.eq.s32.totalorder %v272, %v349
        %vm406 = vcmp.eq.s32.totalorder %v273, %v346
        %vm407 = vcmp.eq.s32.totalorder %v273, %v347
        %vm408 = vcmp.eq.s32.totalorder %v273, %v348
        %vm409 = vcmp.eq.s32.totalorder %v273, %v349
        %vm410 = vcmp.eq.s32.totalorder %v274, %v346
        %vm411 = vcmp.eq.s32.totalorder %v274, %v347
        %vm412 = vcmp.eq.s32.totalorder %v274, %v348
        %vm413 = vcmp.eq.s32.totalorder %v274, %v349
        %vm414 = vmor %vm280, %vm350
        %vm415 = vmor %vm281, %vm351
        %vm416 = vmor %vm282, %vm352
        %vm417 = vmor %vm283, %vm353
        %vm418 = vmor %vm284, %vm354
        %vm419 = vmor %vm285, %vm355
        %vm420 = vmor %vm286, %vm356
        %vm421 = vmor %vm287, %vm357
        %vm422 = vmor %vm288, %vm358
        %vm423 = vmor %vm289, %vm359
        %vm424 = vmor %vm290, %vm360
        %vm425 = vmor %vm291, %vm361
        %vm426 = vmor %vm292, %vm362
        %vm427 = vmor %vm293, %vm363
        %vm428 = vmor %vm294, %vm364
        %vm429 = vmor %vm295, %vm365
        %vm430 = vmor %vm296, %vm366
        %vm431 = vmor %vm297, %vm367
        %vm432 = vmor %vm298, %vm368
        %vm433 = vmor %vm299, %vm369
        %vm434 = vmor %vm300, %vm370
        %vm435 = vmor %vm301, %vm371
        %vm436 = vmor %vm302, %vm372
        %vm437 = vmor %vm303, %vm373
        %vm438 = vmor %vm304, %vm374
        %vm439 = vmor %vm305, %vm375
        %vm440 = vmor %vm306, %vm376
        %vm441 = vmor %vm307, %vm377
        %vm442 = vmor %vm308, %vm378
        %vm443 = vmor %vm309, %vm379
        %vm444 = vmor %vm310, %vm380
        %vm445 = vmor %vm311, %vm381
        %vm446 = vmor %vm312, %vm382
        %vm447 = vmor %vm313, %vm383
        %vm448 = vmor %vm314, %vm384
        %vm449 = vmor %vm315, %vm385
        %vm450 = vmor %vm316, %vm386
        %vm451 = vmor %vm317, %vm387
        %vm452 = vmor %vm318, %vm388
        %vm453 = vmor %vm319, %vm389
        %vm454 = vmor %vm320, %vm390
        %vm455 = vmor %vm321, %vm391
        %vm456 = vmor %vm322, %vm392
        %vm457 = vmor %vm323, %vm393
        %vm458 = vmor %vm324, %vm394
        %vm459 = vmor %vm325, %vm395
        %vm460 = vmor %vm326, %vm396
        %vm461 = vmor %vm327, %vm397
        %vm462 = vmor %vm328, %vm398
        %vm463 = vmor %vm329, %vm399
        %vm464 = vmor %vm330, %vm400
        %vm465 = vmor %vm331, %vm401
        %vm466 = vmor %vm332, %vm402
        %vm467 = vmor %vm333, %vm403
        %vm468 = vmor %vm334, %vm404
        %vm469 = vmor %vm335, %vm405
        %vm470 = vmor %vm336, %vm406
        %vm471 = vmor %vm337, %vm407
        %vm472 = vmor %vm338, %vm408
        %vm473 = vmor %vm339, %vm409
        %vm474 = vmor %vm340, %vm410
        %vm475 = vmor %vm341, %vm411
        %vm476 = vmor %vm342, %vm412
        %vm477 = vmor %vm343, %vm413
        %v478 = vsel %vm414, 1, 0
        %v479 = vsel %vm415, 1, 0
        %v480 = vsel %vm416, 1, 0
        %v481 = vsel %vm417, 1, 0
        %v482 = vsel %vm418, 1, 0
        %v483 = vsel %vm419, 1, 0
        %v484 = vsel %vm420, 1, 0
        %v485 = vsel %vm421, 1, 0
        %v486 = vsel %vm422, 1, 0
        %v487 = vsel %vm423, 1, 0
        %v488 = vsel %vm424, 1, 0
        %v489 = vsel %vm425, 1, 0
        %v490 = vsel %vm426, 1, 0
        %v491 = vsel %vm427, 1, 0
        %v492 = vsel %vm428, 1, 0
        %v493 = vsel %vm429, 1, 0
        %v494 = vsel %vm430, 1, 0
        %v495 = vsel %vm431, 1, 0
        %v496 = vsel %vm432, 1, 0
        %v497 = vsel %vm433, 1, 0
        %v498 = vsel %vm434, 1, 0
        %v499 = vsel %vm435, 1, 0
        %v500 = vsel %vm436, 1, 0
        %v501 = vsel %vm437, 1, 0
        %v502 = vsel %vm438, 1, 0
        %v503 = vsel %vm439, 1, 0
        %v504 = vsel %vm440, 1, 0
        %v505 = vsel %vm441, 1, 0
        %v506 = vsel %vm442, 1, 0
        %v507 = vsel %vm443, 1, 0
        %v508 = vsel %vm444, 1, 0
        %v509 = vsel %vm445, 1, 0
        %v510 = vsel %vm446, 1, 0
        %v511 = vsel %vm447, 1, 0
        %v512 = vsel %vm448, 1, 0
        %v513 = vsel %vm449, 1, 0
        %v514 = vsel %vm450, 1, 0
        %v515 = vsel %vm451, 1, 0
        %v516 = vsel %vm452, 1, 0
        %v517 = vsel %vm453, 1, 0
        %v518 = vsel %vm454, 1, 0
        %v519 = vsel %vm455, 1, 0
        %v520 = vsel %vm456, 1, 0
        %v521 = vsel %vm457, 1, 0
        %v522 = vsel %vm458, 1, 0
        %v523 = vsel %vm459, 1, 0
        %v524 = vsel %vm460, 1, 0
        %v525 = vsel %vm461, 1, 0
        %v526 = vsel %vm462, 1, 0
        %v527 = vsel %vm463, 1, 0
        %v528 = vsel %vm464, 1, 0
        %v529 = vsel %vm465, 1, 0
        %v530 = vsel %vm466, 1, 0
        %v531 = vsel %vm467, 1, 0
        %v532 = vsel %vm468, 1, 0
        %v533 = vsel %vm469, 1, 0
        %v534 = vsel %vm470, 1, 0
        %v535 = vsel %vm471, 1, 0
        %v536 = vsel %vm472, 1, 0
        %v537 = vsel %vm473, 1, 0
        %v538 = vsel %vm474, 1, 0
        %v539 = vsel %vm475, 1, 0
        %v540 = vsel %vm476, 1, 0
        %v541 = vsel %vm477, 1, 0
        %v542 = vcvt.s32.f32 %v478
        %v543 = vcvt.s32.f32 %v479
        %v544 = vcvt.s32.f32 %v480
        %v545 = vcvt.s32.f32 %v481
        %v546 = vcvt.s32.f32 %v482
        %v547 = vcvt.s32.f32 %v483
        %v548 = vcvt.s32.f32 %v484
        %v549 = vcvt.s32.f32 %v485
        %v550 = vcvt.s32.f32 %v486
        %v551 = vcvt.s32.f32 %v487
        %v552 = vcvt.s32.f32 %v488
        %v553 = vcvt.s32.f32 %v489
        %v554 = vcvt.s32.f32 %v490
        %v555 = vcvt.s32.f32 %v491
        %v556 = vcvt.s32.f32 %v492
        %v557 = vcvt.s32.f32 %v493
        %v558 = vcvt.s32.f32 %v494
        %v559 = vcvt.s32.f32 %v495
        %v560 = vcvt.s32.f32 %v496
        %v561 = vcvt.s32.f32 %v497
        %v562 = vcvt.s32.f32 %v498
        %v563 = vcvt.s32.f32 %v499
        %v564 = vcvt.s32.f32 %v500
        %v565 = vcvt.s32.f32 %v501
        %v566 = vcvt.s32.f32 %v502
        %v567 = vcvt.s32.f32 %v503
        %v568 = vcvt.s32.f32 %v504
        %v569 = vcvt.s32.f32 %v505
        %v570 = vcvt.s32.f32 %v506
        %v571 = vcvt.s32.f32 %v507
        %v572 = vcvt.s32.f32 %v508
        %v573 = vcvt.s32.f32 %v509
        %v574 = vcvt.s32.f32 %v510
        %v575 = vcvt.s32.f32 %v511
        %v576 = vcvt.s32.f32 %v512
        %v577 = vcvt.s32.f32 %v513
        %v578 = vcvt.s32.f32 %v514
        %v579 = vcvt.s32.f32 %v515
        %v580 = vcvt.s32.f32 %v516
        %v581 = vcvt.s32.f32 %v517
        %v582 = vcvt.s32.f32 %v518
        %v583 = vcvt.s32.f32 %v519
        %v584 = vcvt.s32.f32 %v520
        %v585 = vcvt.s32.f32 %v521
        %v586 = vcvt.s32.f32 %v522
        %v587 = vcvt.s32.f32 %v523
        %v588 = vcvt.s32.f32 %v524
        %v589 = vcvt.s32.f32 %v525
        %v590 = vcvt.s32.f32 %v526
        %v591 = vcvt.s32.f32 %v527
        %v592 = vcvt.s32.f32 %v528
        %v593 = vcvt.s32.f32 %v529
        %v594 = vcvt.s32.f32 %v530
        %v595 = vcvt.s32.f32 %v531
        %v596 = vcvt.s32.f32 %v532
        %v597 = vcvt.s32.f32 %v533
        %v598 = vcvt.s32.f32 %v534
        %v599 = vcvt.s32.f32 %v535
        %v600 = vcvt.s32.f32 %v536
        %v601 = vcvt.s32.f32 %v537
        %v602 = vcvt.s32.f32 %v538
        %v603 = vcvt.s32.f32 %v539
        %v604 = vcvt.s32.f32 %v540
        %v605 = vcvt.s32.f32 %v541
        %v606 = vld [vmem:[%s1] sm:$0xff]
        %608 = vset.pattern.permute.xlu0 0
        %609 = vperm.xlu0 %608, %v606
        %v610 = vpop.permute.xlu0 %609
        %612 = vmatpush.msra.mxu0 %v602
        %613 = vmatpush.msra.mxu0 %v598
        %614 = vmatpush.msra.mxu0 %v594
        %615 = vmatpush.msra.mxu0 %v590
        %616 = vmatpush.msra.mxu0 %v586
        %617 = vmatpush.msra.mxu0 %v582
        %618 = vmatpush.msra.mxu0 %v578
        %619 = vmatpush.msra.mxu0 %v574
        %620 = vmatpush.msra.mxu0 %v570
        %621 = vmatpush.msra.mxu0 %v566
        %622 = vmatpush.msra.mxu0 %v562
        %623 = vmatpush.msra.mxu0 %v558
        %624 = vmatpush.msra.mxu0 %v554
        %625 = vmatpush.msra.mxu0 %v550
        %626 = vmatpush.msra.mxu0 %v546
        %627 = vmatpush.msra.mxu0 %v542
        %628 = vmatmul.f32.gmra.mxu0 %v257
        %v629 = vpop.f32.mrf.mxu0
        %v630 = vadd.f32 %v610, %v629
        %631 = vdwg.mxu0
        %632 = vmatpush.msra.mxu0 %v603
        %633 = vmatpush.msra.mxu0 %v599
        %634 = vmatpush.msra.mxu0 %v595
        %635 = vmatpush.msra.mxu0 %v591
        %636 = vmatpush.msra.mxu0 %v587
        %637 = vmatpush.msra.mxu0 %v583
        %638 = vmatpush.msra.mxu0 %v579
        %639 = vmatpush.msra.mxu0 %v575
        %640 = vmatpush.msra.mxu0 %v571
        %641 = vmatpush.msra.mxu0 %v567
        %642 = vmatpush.msra.mxu0 %v563
        %643 = vmatpush.msra.mxu0 %v559
        %644 = vmatpush.msra.mxu0 %v555
        %645 = vmatpush.msra.mxu0 %v551
        %646 = vmatpush.msra.mxu0 %v547
        %647 = vmatpush.msra.mxu0 %v543
        %648 = vmatmul.f32.gmra.mxu0 %v257
        %v649 = vpop.f32.mrf.mxu0
        %v650 = vadd.f32 %v610, %v649
        %651 = vdwg.mxu0
        %652 = vmatpush.msra.mxu0 %v604
        %653 = vmatpush.msra.mxu0 %v600
        %654 = vmatpush.msra.mxu0 %v596
        %655 = vmatpush.msra.mxu0 %v592
        %656 = vmatpush.msra.mxu0 %v588
        %657 = vmatpush.msra.mxu0 %v584
        %658 = vmatpush.msra.mxu0 %v580
        %659 = vmatpush.msra.mxu0 %v576
        %660 = vmatpush.msra.mxu0 %v572
        %661 = vmatpush.msra.mxu0 %v568
        %662 = vmatpush.msra.mxu0 %v564
        %663 = vmatpush.msra.mxu0 %v560
        %664 = vmatpush.msra.mxu0 %v556
        %665 = vmatpush.msra.mxu0 %v552
        %666 = vmatpush.msra.mxu0 %v548
        %667 = vmatpush.msra.mxu0 %v544
        %668 = vmatmul.f32.gmra.mxu0 %v257
        %v669 = vpop.f32.mrf.mxu0
        %v670 = vadd.f32 %v610, %v669
        %671 = vdwg.mxu0
        %672 = vmatpush.msra.mxu0 %v605
        %673 = vmatpush.msra.mxu0 %v601
        %674 = vmatpush.msra.mxu0 %v597
        %675 = vmatpush.msra.mxu0 %v593
        %676 = vmatpush.msra.mxu0 %v589
        %677 = vmatpush.msra.mxu0 %v585
        %678 = vmatpush.msra.mxu0 %v581
        %679 = vmatpush.msra.mxu0 %v577
        %680 = vmatpush.msra.mxu0 %v573
        %681 = vmatpush.msra.mxu0 %v569
        %682 = vmatpush.msra.mxu0 %v565
        %683 = vmatpush.msra.mxu0 %v561
        %684 = vmatpush.msra.mxu0 %v557
        %685 = vmatpush.msra.mxu0 %v553
        %686 = vmatpush.msra.mxu0 %v549
        %687 = vmatpush.msra.mxu0 %v545
        %688 = vmatmul.f32.gmra.mxu0 %v257
        %v689 = vpop.f32.mrf.mxu0
        %v690 = vadd.f32 %v610, %v689
        %691 = vdwg.mxu0
        %692 = vst [vmem:[%s253] sm:$0xff] %v630
        %693 = vst [vmem:[%s253 + $0x8] sm:$0xff] %v650
        %694 = vst [vmem:[%s253 + $0x10] sm:$0xff] %v670
        %695 = vst [vmem:[%s253 + $0x18] sm:$0xff] %v690
        %s696 = sand.u32 %s126, 1
        %s697 = scalar_lea.sflag [#allocation4], %s696
        %s698 = sand.u32 %s126, 1
        %s699 = smul.addr %s698, 32
        %s700 = scalar_lea.vmem [#allocation7], %s699
        // Predicated region
        $region45: #{tpu_custom_call.1} parent=35 // pred_check
          %p701 = pneg %p136
        $region46: #{tpu_custom_call.1} parent=35 // pred_check_branch
          %703 = sbr.rel (%p701) target = $region48
        $region47: #{tpu_custom_call.1} parent=35 // pred_region
          %s704 = smul.u32 4, %s24
          %706 = vsyncadd %s697, 0
          %s707 = smul.addr %s704, 8
          %s708 = scalar_lea.hbm %s4, %s707
          %s710 = sshll.u32 %s700, 4
          %s711 = int_to_ptr.vmem [resolvable:$true] %s710
          %s712 = sshll.u32 %s708, 4
          %s713 = int_to_ptr.hbm [resolvable:$true] %s712
          %715 = dma.vmem_to_hbm [thread:$0]  %s711, 512, %s713, %s697
        $region48: #{tpu_custom_call.1} parent=35 // pred_fallthru
          _
      $region36: #{tpu_custom_call.1} parent=5 // pred_fallthru
        _
      %p716 = scmp.le.s32.totalorder 2, %s19
      // Predicated region
      $region49: #{tpu_custom_call.1} parent=5 // pred_check
        %p717 = pneg %p716
      $region50: #{tpu_custom_call.1} parent=5 // pred_check_branch
        %719 = sbr.rel (%p717) target = $region52
      $region51: #{tpu_custom_call.1} parent=5 // pred_region
        %s720 = ssub.s32 %s19, 2
        // Predicated region
        $region53: #{tpu_custom_call.1} parent=51 // pred_check
          %p721 = pneg %p142
        $region54: #{tpu_custom_call.1} parent=51 // pred_check_branch
          %723 = sbr.rel (%p721) target = $region56
        $region55: #{tpu_custom_call.1} parent=51 // pred_region
          %s724 = sand.u32 %s127, 1
          %s725 = scalar_lea.sflag [#allocation4], %s724
          %s726 = sand.u32 %s127, 1
          %s727 = smul.addr %s726, 32
          %s728 = scalar_lea.vmem [#allocation7], %s727
          %730 = dma.done %s725, 512
        $region56: #{tpu_custom_call.1} parent=51 // pred_fallthru
          _
      $region52: #{tpu_custom_call.1} parent=5 // pred_fallthru
        _
    $region6: #{tpu_custom_call.1} parent=1 // loop_footer
      %s23 = sadd.s32 1, %s19
    $region7: #{tpu_custom_call.1} parent=1 // loop_footer_branch
      %18 = sbr.rel target = $region3
    $region8: #{tpu_custom_call.1} parent=1 // loop_exit
      _
    %731 = vsyncpa [#allocation3], 1
    %s732 = scalar_lea.sflag [#allocation3], 1
    %733 = vsyncpa %s732, 1
    %734 = vsyncpa [#allocation6], 1
    %s735 = scalar_lea.sflag [#allocation6], 1
    %736 = vsyncpa %s735, 1
    %737 = vsyncpa [#allocation4], 1
    %s738 = scalar_lea.sflag [#allocation4], 1
    %739 = vsyncpa %s738, 1

</llo_original>
